<compile_context>
chip_gen: v5e
topology: v5e:2x2
jax: 0.10.0
libtpu: 0.0.40
codegen_flags: <defaults>
</compile_context>

<pallas_src>
import math

import jax
import jax.numpy as jnp
from jax.experimental import pallas as pl
from jax.experimental.pallas import tpu as pltpu


def _round_up(x, m):
    return ((x + m - 1) // m) * m


def _concat_edge_encoder_kernel(
    cn_ref,      # (TILE_B, 2E)  compute dtype  -- [curr_emb || next_emb]
    state_ref,   # (TILE_B, S)   compute dtype
    wcn_ref,     # (2E, E)       compute dtype  -- Wo[:2E]
    wst_ref,     # (S, E)        compute dtype  -- Ws @ Wo[2E:]   (folded)
    b_ref,       # (1, E)        f32            -- bs @ Wo[2E:] + bo (folded)
    out_ref,     # (TILE_B, E)   f32
):
    # Two independent accumulating MXU dots (f32 accumulation) + bias add.
    h = jnp.dot(cn_ref[...], wcn_ref[...], preferred_element_type=jnp.float32)
    h = h + jnp.dot(state_ref[...], wst_ref[...],
                    preferred_element_type=jnp.float32)
    out_ref[...] = (h + b_ref[...]).astype(out_ref.dtype)


def prepare_params(params, compute_dtype=jnp.float32):
    """Fold the state Linear into out_linear and pre-cast weights ONCE.

    params: dict with 'ws' (S, E), 'bs' (E,), 'wo' (3E, E), 'bo' (E,)
            (Linear weights stored transposed vs. PyTorch: (in, out)).
    Returns prepared params usable by concat_edge_encoder; hoists the fold and
    the dtype cast out of the per-call hot path.
    """
    cdt = jnp.dtype(compute_dtype)
    ws = jnp.asarray(params["ws"], jnp.float32)   # (S, E)
    bs = jnp.asarray(params["bs"], jnp.float32)   # (E,)
    wo = jnp.asarray(params["wo"], jnp.float32)   # (3E, E)
    bo = jnp.asarray(params["bo"], jnp.float32)   # (E,)
    E = wo.shape[-1]
    wo_state = wo[2 * E:]                          # (E, E) -- state slice of Wo

    # Fold in f32 with HIGHEST precision *before* any bf16 cast.
    w_state = jnp.dot(ws, wo_state, precision=jax.lax.Precision.HIGHEST)
    b = jnp.dot(bs, wo_state, precision=jax.lax.Precision.HIGHEST) + bo

    return {
        "w_cn": wo[: 2 * E].astype(cdt),                 # (2E, E)
        "w_state": w_state.astype(cdt),                  # (S, E)
        "b": b.reshape(1, E).astype(jnp.float32),        # (1, E) f32
        "_compute_dtype": cdt,
    }


def concat_edge_encoder(curr_node_id, next_node_id, state, node_emb, params,
                        *, compute_dtype=jnp.float32, tile_b=512):
    """Pallas forward of ConcatEdgeEncoder (inference, state_dim > 0).

    curr_node_id, next_node_id : int   [B]
    state                      : f32   [B, S]
    node_emb                   : f32   [B, N, E]
    params: raw params (see prepare_params) or an already-prepared dict.
    returns f32 [B, E]
    """
    B, N, E = node_emb.shape
    S = state.shape[-1]
    if S == 0:
        # TODO(synk): state_dim == 0 branch not wired up.
        raise NotImplementedError("state_dim == 0 path not implemented")

    if "w_cn" in params:                      # already folded / cast
        prep = params
        cdt = jnp.dtype(prep.get("_compute_dtype", compute_dtype))
    else:
        cdt = jnp.dtype(compute_dtype)
        prep = prepare_params(params, cdt)

    # --- Single merged gather: both node rows per batch element -> [B, 2E].
    #     Clamp ids so an out-of-range id can never read adjacent memory.
    cid = jnp.clip(curr_node_id.astype(jnp.int32), 0, N - 1)
    nid = jnp.clip(next_node_id.astype(jnp.int32), 0, N - 1)
    ids = jnp.stack([cid, nid], axis=1)                              # (B, 2)
    cn = jnp.take_along_axis(node_emb, ids[:, :, None], axis=1)      # (B, 2, E)
    cn = cn.reshape(B, 2 * E).astype(cdt)                            # (B, 2E)
    state_c = state.astype(cdt)                                      # (B, S)

    # --- Batch tiling.  Only pad up to the sublane tile (tiny); ragged last
    #     grid blocks are handled by Pallas' masked remainder block.
    sub = 16 if cdt.itemsize < 4 else 8
    tile_b = max(sub, _round_up(tile_b, sub))
    B_pad = _round_up(B, sub)
    if B_pad != B:
        cn = jnp.pad(cn, ((0, B_pad - B), (0, 0)))
        state_c = jnp.pad(state_c, ((0, B_pad - B), (0, 0)))

    TILE_B = min(tile_b, B_pad)
    if B_pad > sub:
        # >= 2 grid steps so both v7x TensorCores get work (harmless on v5e/v6e).
        TILE_B = min(TILE_B, _round_up(pl.cdiv(B_pad, 2), sub))
    grid = (pl.cdiv(B_pad, TILE_B),)

    # Right-sized VMEM limit: double-buffered streamed operands + resident weights.
    streamed = TILE_B * ((2 * E + S) * cdt.itemsize + E * 4)
    weights = (2 * E * E + S * E) * cdt.itemsize + E * 4
    vmem_limit = int(min(64 << 20, max(4 << 20, 4 * streamed + 4 * weights)))

    out = pl.pallas_call(
        _concat_edge_encoder_kernel,
        out_shape=jax.ShapeDtypeStruct((B_pad, E), jnp.float32),
        grid=grid,
        in_specs=[
            pl.BlockSpec((TILE_B, 2 * E), lambda i: (i, 0)),   # [curr||next]
            pl.BlockSpec((TILE_B, S), lambda i: (i, 0)),       # state
            # Constant index maps -> weights stay VMEM-resident across steps.
            pl.BlockSpec((2 * E, E), lambda i: (0, 0)),        # Wo[:2E]
            pl.BlockSpec((S, E), lambda i: (0, 0)),            # folded Ws
            pl.BlockSpec((1, E), lambda i: (0, 0)),            # folded bias
        ],
        out_specs=pl.BlockSpec((TILE_B, E), lambda i: (i, 0)),
        compiler_params=pltpu.CompilerParams(
            dimension_semantics=("parallel",),                 # batch tiles independent
            vmem_limit_bytes=vmem_limit,
        ),
    )(cn, state_c, prep["w_cn"], prep["w_state"], prep["b"])

    return out[:B] if out.shape[0] != B else out


def init_params(key, state_dim, emb_dim):
    """Deterministic init matching the module's reset_parameters scheme
    (uniform(-stdv, stdv), stdv = 1/sqrt(param.size(-1)))."""
    k1, k2, k3, k4 = jax.random.split(key, 4)
    in_out = (2 + 1) * emb_dim  # state_dim > 0 branch

    # PyTorch stores Linear weight as (out, in); we transpose to (in, out).
    stdv_ws = 1.0 / math.sqrt(state_dim)
    ws_pt = jax.random.uniform(k1, (emb_dim, state_dim), jnp.float32, -stdv_ws, stdv_ws)
    stdv_b = 1.0 / math.sqrt(emb_dim)
    bs = jax.random.uniform(k2, (emb_dim,), jnp.float32, -stdv_b, stdv_b)

    stdv_wo = 1.0 / math.sqrt(in_out)
    wo_pt = jax.random.uniform(k3, (emb_dim, in_out), jnp.float32, -stdv_wo, stdv_wo)
    bo = jax.random.uniform(k4, (emb_dim,), jnp.float32, -stdv_b, stdv_b)

    return {
        "ws": ws_pt.T,   # (S, E)
        "bs": bs,        # (E,)
        "wo": wo_pt.T,   # (3E, E)
        "bo": bo,        # (E,)
    }


def reference(curr_node_id, next_node_id, state, node_emb, params):
    """Pure-JAX reference mirroring the PyTorch forward (eval-mode dropout)."""
    curr_emb = jnp.take_along_axis(
        node_emb, curr_node_id[:, None, None].astype(jnp.int32), axis=1
    )[:, 0, :]
    next_emb = jnp.take_along_axis(
        node_emb, next_node_id[:, None, None].astype(jnp.int32), axis=1
    )[:, 0, :]
    state_emb = state @ params["ws"] + params["bs"]
    edge_emb = jnp.concatenate([curr_emb, next_emb, state_emb], axis=-1)
    return edge_emb @ params["wo"] + params["bo"]


if __name__ == "__main__":
    B = 2          # batch_size
    N = 8          # num_nodes
    E = 32         # emb_dim
    S = 4          # state_dim

    key = jax.random.PRNGKey(0)
    (k_params, k_node, k_state, k_cid, k_nid,
     k_node2, k_state2, k_cid2, k_nid2) = jax.random.split(key, 9)

    params = init_params(k_params, S, E)

    node_emb = jax.random.normal(k_node, (B, N, E), jnp.float32)
    state = jax.random.normal(k_state, (B, S), jnp.float32)
    curr_node_id = jax.random.randint(k_cid, (B,), 0, N, jnp.int32)
    next_node_id = jax.random.randint(k_nid, (B,), 0, N, jnp.int32)

    ref = reference(curr_node_id, next_node_id, state, node_emb, params)

    # f32 path (raw params; fold happens inside): tight tolerance.
    out = jax.block_until_ready(
        concat_edge_encoder(curr_node_id, next_node_id, state, node_emb, params))
    assert out.shape == (B, E)
    assert jnp.allclose(out, ref, atol=2e-5, rtol=2e-5), float(jnp.abs(out - ref).max())

    # bf16 operands (f32 MXU accumulation), weights folded/cast ONCE up front.
    prep_bf16 = prepare_params(params, compute_dtype=jnp.bfloat16)
    out_bf16 = jax.block_until_ready(
        concat_edge_encoder(curr_node_id, next_node_id, state, node_emb, prep_bf16))
    assert out_bf16.shape == (B, E)
    assert jnp.allclose(out_bf16, ref, atol=5e-2, rtol=5e-2), float(jnp.abs(out_bf16 - ref).max())

    # Multi-tile path: 2 grid steps + ragged (masked) last block, no batch pad.
    B2 = 520
    node_emb2 = jax.random.normal(k_node2, (B2, N, E), jnp.float32)
    state2 = jax.random.normal(k_state2, (B2, S), jnp.float32)
    cid2 = jax.random.randint(k_cid2, (B2,), 0, N, jnp.int32)
    nid2 = jax.random.randint(k_nid2, (B2,), 0, N, jnp.int32)
    ref2 = reference(cid2, nid2, state2, node_emb2, params)
    out2 = jax.block_until_ready(
        concat_edge_encoder(cid2, nid2, state2, node_emb2, params))
    assert out2.shape == (B2, E)
    assert jnp.allclose(out2, ref2, atol=2e-5, rtol=2e-5), float(jnp.abs(out2 - ref2).max())

    print("KERNEL_OK")
</pallas_src>

<mosaic_0001>
module attributes {stable_mosaic.version = 11 : i64} {
  func.func @_concat_edge_encoder_kernel(%arg0: i32, %arg1: memref<8x64xf32, #tpu.memory_space<vmem>>, %arg2: memref<8x4xf32, #tpu.memory_space<vmem>>, %arg3: memref<64x32xf32, #tpu.memory_space<vmem>>, %arg4: memref<4x32xf32, #tpu.memory_space<vmem>>, %arg5: memref<1x32xf32, #tpu.memory_space<vmem>>, %arg6: memref<8x32xf32, #tpu.memory_space<vmem>>) attributes {dimension_semantics = [#tpu.dimension_semantics<parallel>], iteration_bounds = array<i64: 1>, scalar_prefetch = 0 : i64, scratch_operands = 0 : i64, tpu.core_type = #tpu.core_type<tc>, window_params = [{transform_indices = @transform_0, window_bounds = array<i64: 8, 64>}, {transform_indices = @transform_1, window_bounds = array<i64: 8, 4>}, {pipeline_mode = #tpu.pipeline_mode<synchronous>, transform_indices = @transform_2, window_bounds = array<i64: 64, 32>}, {pipeline_mode = #tpu.pipeline_mode<synchronous>, transform_indices = @transform_3, window_bounds = array<i64: 4, 32>}, {pipeline_mode = #tpu.pipeline_mode<synchronous>, transform_indices = @transform_4, window_bounds = array<i64: 1, 32>}, {transform_indices = @transform_5, window_bounds = array<i64: 8, 32>}]} {
    %c0 = arith.constant 0 : index
    %c0_0 = arith.constant 0 : index
    %0 = vector.load %arg1[%c0, %c0_0] : memref<8x64xf32, #tpu.memory_space<vmem>>, vector<8x64xf32>
    %c0_1 = arith.constant 0 : index
    %c0_2 = arith.constant 0 : index
    %1 = vector.load %arg3[%c0_1, %c0_2] : memref<64x32xf32, #tpu.memory_space<vmem>>, vector<64x32xf32>
    %cst = arith.constant dense<0.000000e+00> : vector<8x32xf32>
    %2 = tpu.matmul %0, %1, %cst {dimension_numbers = #tpu.dot_dimension_numbers<[1], [0], [0], [1], [0, 0, 1, 1], [], []>} : vector<8x64xf32>, vector<64x32xf32>, vector<8x32xf32> -> vector<8x32xf32>
    %c0_3 = arith.constant 0 : index
    %c0_4 = arith.constant 0 : index
    %3 = vector.load %arg2[%c0_3, %c0_4] : memref<8x4xf32, #tpu.memory_space<vmem>>, vector<8x4xf32>
    %c0_5 = arith.constant 0 : index
    %c0_6 = arith.constant 0 : index
    %4 = vector.load %arg4[%c0_5, %c0_6] : memref<4x32xf32, #tpu.memory_space<vmem>>, vector<4x32xf32>
    %cst_7 = arith.constant dense<0.000000e+00> : vector<8x32xf32>
    %5 = tpu.matmul %3, %4, %cst_7 {dimension_numbers = #tpu.dot_dimension_numbers<[1], [0], [0], [1], [0, 0, 1, 1], [], []>} : vector<8x4xf32>, vector<4x32xf32>, vector<8x32xf32> -> vector<8x32xf32>
    %6 = arith.addf %2, %5 : vector<8x32xf32>
    %c0_8 = arith.constant 0 : index
    %c0_9 = arith.constant 0 : index
    %7 = vector.load %arg5[%c0_8, %c0_9] : memref<1x32xf32, #tpu.memory_space<vmem>>, vector<1x32xf32>
    %8 = vector.broadcast %7 : vector<1x32xf32> to vector<8x32xf32>
    %9 = arith.addf %6, %8 : vector<8x32xf32>
    %c0_10 = arith.constant 0 : index
    %c0_11 = arith.constant 0 : index
    %10 = vector.load %arg6[%c0_10, %c0_11] : memref<8x32xf32, #tpu.memory_space<vmem>>, vector<8x32xf32>
    tpu.vector_store %arg6[%c0_10, %c0_11], %9 {strides = array<i32>} : memref<8x32xf32, #tpu.memory_space<vmem>>, vector<8x32xf32>,
    return
  }
  func.func @transform_0(%arg0: i32) -> (i32, i32) {
    %c0_i32 = arith.constant 0 : i32
    %c0_i32_0 = arith.constant 0 : i32
    return %arg0, %c0_i32 : i32, i32
  }
  func.func @transform_1(%arg0: i32) -> (i32, i32) {
    %c0_i32 = arith.constant 0 : i32
    %c0_i32_0 = arith.constant 0 : i32
    return %arg0, %c0_i32 : i32, i32
  }
  func.func @transform_2(%arg0: i32) -> (i32, i32) {
    %c0_i32 = arith.constant 0 : i32
    %c0_i32_0 = arith.constant 0 : i32
    %c0_i32_1 = arith.constant 0 : i32
    return %c0_i32, %c0_i32_0 : i32, i32
  }
  func.func @transform_3(%arg0: i32) -> (i32, i32) {
    %c0_i32 = arith.constant 0 : i32
    %c0_i32_0 = arith.constant 0 : i32
    %c0_i32_1 = arith.constant 0 : i32
    return %c0_i32, %c0_i32_0 : i32, i32
  }
  func.func @transform_4(%arg0: i32) -> (i32, i32) {
    %c0_i32 = arith.constant 0 : i32
    %c0_i32_0 = arith.constant 0 : i32
    %c0_i32_1 = arith.constant 0 : i32
    return %c0_i32, %c0_i32_0 : i32, i32
  }
  func.func @transform_5(%arg0: i32) -> (i32, i32) {
    %c0_i32 = arith.constant 0 : i32
    %c0_i32_0 = arith.constant 0 : i32
    return %arg0, %c0_i32 : i32, i32
  }
}

</mosaic_0001>

<llo_original>
// kernel: tpu_custom_call.1
$region0: #{tpu_custom_call.1}
  #allocation0 [shape = 'u32[]', space=smem, size = 0x4, offset = 0x4, fixed_abs, tag = 'smem constant byte address 0x4 - core index']
  #allocation1 [shape = 'u32[72,128]{1,0:T(1,128)}', space=vmem, size = 0x9000, scoped, tag = 'internal scratch']
  %s0 = inlined_call_operand.vmem [shape: f32[8,64], index: 0, kind: input, shape index: {}]
  %s1 = inlined_call_operand.vmem [shape: f32[8,4], index: 1, kind: input, shape index: {}]
  %s2 = inlined_call_operand.vmem [shape: f32[64,32], index: 2, kind: input, shape index: {}]
  %s3 = inlined_call_operand.vmem [shape: f32[4,32], index: 3, kind: input, shape index: {}]
  %s4 = inlined_call_operand.vmem [shape: f32[1,32], index: 4, kind: input, shape index: {}]
  %s5 = inlined_call_operand.hbm [shape: f32[8,32], index: 5, kind: output, shape index: {}]
  %s6 = sld [smem:[#allocation0]]
  $region30: #{tpu_custom_call.1} parent=0
    _
  %s8 = ssub.s32 1, %s6
  %s9 = scalar_select 0, %s8, %s6
  $region1: #{tpu_custom_call.1} parent=0
    #allocation2 [shape = 'u8[4096]{0}', space=vmem, size = 0x1000, scoped, tag = 'output window, operand 0, single buffered']
    #allocation3 [shape = 's32[1]{0}', space=sflag, size = 0x4, scoped, tag = 'scoped memory for tpu_custom_call.1']
    %10 = vsyncpa [#allocation3], 0
    // Predicated region
    $region2: #{tpu_custom_call.1} parent=1 // pred_check
      _
    $region3: #{tpu_custom_call.1} parent=1 // pred_check_branch
      %12 = sbr.rel (0) target = $region5
    $region4: #{tpu_custom_call.1} parent=1 // pred_region
      _
    $region5: #{tpu_custom_call.1} parent=1 // pred_fallthru
      _
    // Predicated region
    $region6: #{tpu_custom_call.1} parent=1 // pred_check
      _
    $region7: #{tpu_custom_call.1} parent=1 // pred_check_branch
      %14 = sbr.rel (0) target = $region9
    $region8: #{tpu_custom_call.1} parent=1 // pred_region
      _
    $region9: #{tpu_custom_call.1} parent=1 // pred_fallthru
      _
    // Predicated region
    $region10: #{tpu_custom_call.1} parent=1 // pred_check
      _
    $region11: #{tpu_custom_call.1} parent=1 // pred_check_branch
      %16 = sbr.rel (0) target = $region13
    $region12: #{tpu_custom_call.1} parent=1 // pred_region
      _
    $region13: #{tpu_custom_call.1} parent=1 // pred_fallthru
      _
    // Predicated region
    $region14: #{tpu_custom_call.1} parent=1 // pred_check
      _
    $region15: #{tpu_custom_call.1} parent=1 // pred_check_branch
      %18 = sbr.rel (0) target = $region17
    $region16: #{tpu_custom_call.1} parent=1 // pred_region
      _
    $region17: #{tpu_custom_call.1} parent=1 // pred_fallthru
      _
    // Predicated region
    $region18: #{tpu_custom_call.1} parent=1 // pred_check
      _
    $region19: #{tpu_custom_call.1} parent=1 // pred_check_branch
      %20 = sbr.rel (0) target = $region21
    $region20: #{tpu_custom_call.1} parent=1 // pred_region
      _
    $region21: #{tpu_custom_call.1} parent=1 // pred_fallthru
      _
    %v21 = vld [vmem:[%s0] sm:$0xff]
    %v22 = vld [vmem:[%s2] sm:$0xff]
    %v23 = vld [vmem:[%s2 + $0x8] sm:$0xff]
    %v24 = vld [vmem:[%s2 + $0x10] sm:$0xff]
    %v25 = vld [vmem:[%s2 + $0x18] sm:$0xff]
    %v26 = vld [vmem:[%s2 + $0x20] sm:$0xff]
    %v27 = vld [vmem:[%s2 + $0x28] sm:$0xff]
    %v28 = vld [vmem:[%s2 + $0x30] sm:$0xff]
    %v29 = vld [vmem:[%s2 + $0x38] sm:$0xff]
    %v30 = vld [vmem:[%s1] sm:$0xff]
    %v31 = vld [vmem:[%s3] sm:$0xf]
    %vm32 = vcmask 31744
    %v34 = vsel %vm32, %v30, 0
    %vm36 = vcmask 1043456
    %v38 = vsel %vm36, %v31, 0
    %40 = vmatpush.msra.mxu0 0.0
    %41 = vmatpush.msra.mxu0 0.0
    %42 = vmatpush.msra.mxu0 0.0
    %43 = vmatpush.msra.mxu0 0.0
    %44 = vmatpush.msra.mxu0 0.0
    %45 = vmatpush.msra.mxu0 0.0
    %46 = vmatpush.msra.mxu0 0.0
    %47 = vmatpush.msra.mxu0 0.0
    %48 = vmatpush.msra.mxu0 0.0
    %49 = vmatpush.msra.mxu0 0.0
    %50 = vmatpush.msra.mxu0 0.0
    %51 = vmatpush.msra.mxu0 0.0
    %52 = vmatpush.msra.mxu0 0.0
    %53 = vmatpush.msra.mxu0 0.0
    %54 = vmatpush.msra.mxu0 0.0
    %55 = vmatpush.msra.mxu0 %v38
    %56 = vmatmul.f32.gmra.mxu0 %v34
    %v57 = vpop.f32.mrf.mxu0
    %v58 = vadd.f32 0.0, %v57
    %59 = vdwg.mxu0
    %vm60 = vcmask 523264
    %v62 = vsel %vm60, %v21, 0
    %64 = vmatpush.msra.mxu0 0.0
    %65 = vmatpush.msra.mxu0 0.0
    %66 = vmatpush.msra.mxu0 0.0
    %67 = vmatpush.msra.mxu0 0.0
    %68 = vmatpush.msra.mxu0 0.0
    %69 = vmatpush.msra.mxu0 0.0
    %70 = vmatpush.msra.mxu0 0.0
    %71 = vmatpush.msra.mxu0 0.0
    %72 = vmatpush.msra.mxu0 %v29
    %73 = vmatpush.msra.mxu0 %v28
    %74 = vmatpush.msra.mxu0 %v27
    %75 = vmatpush.msra.mxu0 %v26
    %76 = vmatpush.msra.mxu0 %v25
    %77 = vmatpush.msra.mxu0 %v24
    %78 = vmatpush.msra.mxu0 %v23
    %79 = vmatpush.msra.mxu0 %v22
    %80 = vmatmul.f32.gmra.mxu0 %v62
    %v81 = vpop.f32.mrf.mxu0
    %v82 = vadd.f32 %v58, %v81
    %83 = vdwg.mxu0
    %v84 = vld [vmem:[%s4] sm:$0x1]
    %v86 = vperm.slane %v84, 0
    %v88 = vadd.f32 %v82, %v86
    %vm89 = vcmask 261120
    %90 = vst.msk [vmem:[#allocation2] sm:$0xff] %vm89, %v88
    // Predicated region
    $region22: #{tpu_custom_call.1} parent=1 // pred_check
      _
    $region23: #{tpu_custom_call.1} parent=1 // pred_check_branch
      %92 = sbr.rel (0) target = $region25
    $region24: #{tpu_custom_call.1} parent=1 // pred_region
      %94 = vsyncadd [#allocation3], 0
      %s96 = sshll.u32 [#allocation2], 4
      %s97 = int_to_ptr.vmem [resolvable:$true] %s96
      %s98 = sshll.u32 %s5, 4
      %s99 = int_to_ptr.hbm [resolvable:$true] %s98
      %101 = dma.vmem_to_hbm [thread:$0]  %s97, 128, %s99, [#allocation3]
    $region25: #{tpu_custom_call.1} parent=1 // pred_fallthru
      _
    // Predicated region
    $region26: #{tpu_custom_call.1} parent=1 // pred_check
      _
    $region27: #{tpu_custom_call.1} parent=1 // pred_check_branch
      %103 = sbr.rel (0) target = $region29
    $region28: #{tpu_custom_call.1} parent=1 // pred_region
      %105 = dma.done [#allocation3], 128
    $region29: #{tpu_custom_call.1} parent=1 // pred_fallthru
      _
    %106 = vsyncpa [#allocation3], 1

</llo_original>
